<compile_context>
chip_gen: v7x
topology: tpu7x:2x2x1
jax: 0.10.0
libtpu: 0.0.40
codegen_flags: <defaults>
</compile_context>

<pallas_src>
import functools

import jax
import jax.numpy as jnp
from jax.experimental import pallas as pl
from jax.experimental.pallas import tpu as pltpu


def _round_up(n, m):
    return ((n + m - 1) // m) * m


def _tpu_config():
    """Generation-aware VMEM budget, scoped-VMEM limit, and grid semantics.

    v5e / v6e : 128 MiB physical VMEM (default scoped limit is only 16/32 MiB)
                -> raise the limit explicitly, use big tiles.
    v7x       : 64 MiB VMEM per TensorCore, 2 TCs -> keep the pipelined
                working set well under the per-core budget and shard the row
                grid across both cores (CORE_PARALLEL).
    unknown   : conservative settings that compile on every generation.
    """
    vmem_phys = None
    try:
        info = pltpu.get_tpu_info()
        vmem_phys = int(getattr(info, "vmem_capacity_bytes", 0)) or None
    except Exception:
        vmem_phys = None

    if vmem_phys is not None and vmem_phys <= (64 << 20):
        # v7x-class part: 64 MiB per TensorCore, 2 TensorCores per chip.
        return {
            "vmem_budget": 36 << 20,   # ~<=6 MiB per tile once double-buffered
            "vmem_limit": 48 << 20,
            "semantics": (pltpu.CORE_PARALLEL,),
        }
    if vmem_phys is not None:
        # 128 MiB part (v5e / v6e): plenty of headroom beyond the default limit.
        return {
            "vmem_budget": 64 << 20,   # ~8-16 MiB tiles depending on dtype
            "vmem_limit": 96 << 20,
            "semantics": (pltpu.PARALLEL,),
        }
    # Detection failed: settings that are valid everywhere (incl. v7x).
    return {
        "vmem_budget": 24 << 20,
        "vmem_limit": 48 << 20,
        "semantics": (pltpu.PARALLEL,),
    }


def _pick_row_tile(rows, features, in_itemsize, out_itemsize, vmem_budget_bytes):
    """Row tile sized so the whole pipelined working set fits the VMEM budget.

    Working set per row ~= double-buffered input tile + double-buffered output
    tile + ~3 f32-wide temporaries (upcast / diff / result) created inside the
    kernel. dtype-aware: bf16 activations get proportionally taller tiles
    without blowing the f32 scratch budget.
    """
    per_row_bytes = features * (2 * in_itemsize + 2 * out_itemsize + 3 * 4)
    rt = max(8, vmem_budget_bytes // per_row_bytes)
    if rt >= 64:
        rt = (rt // 32) * 32      # multiple of 32: sublane packing for any dtype
    else:
        rt = max(8, (rt // 8) * 8)
    # No point allocating VMEM buffers taller than the data itself.
    rt = min(rt, _round_up(rows, 8))
    return int(max(8, rt))


def _layernorm_kernel(x_ref, a_ref, b_ref, o_ref, *, eps, features):
    # x_ref: (TR, F) tile; a_ref / b_ref: (1, F) broadcast params.
    x = x_ref[...].astype(jnp.float32)
    mean = jnp.mean(x, axis=-1, keepdims=True)
    diff = x - mean
    # torch.std default uses Bessel's correction (divide by N - 1).
    var = jnp.sum(diff * diff, axis=-1, keepdims=True) * jnp.float32(
        1.0 / (features - 1)
    )
    d = jnp.sqrt(var) + jnp.float32(eps)                  # (TR, 1) per row
    # EUP approximate reciprocal (otherwise-idle slot) + one Newton step to
    # recover ~f32 accuracy, instead of per-element VPU divides.
    r = pl.reciprocal(d, approx=True)
    inv = r * (jnp.float32(2.0) - d * r)                  # Newton refinement
    a = a_ref[...].astype(jnp.float32)                    # (1, F)
    b = b_ref[...].astype(jnp.float32)                    # (1, F)
    # Fused broadcast-multiply chain: diff * (a * inv) + b.
    o_ref[...] = (diff * (a * inv) + b).astype(o_ref.dtype)


def layer_norm(x, a_2, b_2, eps=1e-6, row_tile=None):
    """x: (batch, seq, features); a_2, b_2: (features,)."""
    batch, seq, features = x.shape
    rows = batch * seq
    if features < 2:
        # torch.std (unbiased) is NaN for a single element; not supported here.
        raise ValueError("layer_norm requires features >= 2 (unbiased std).")

    cfg = _tpu_config()
    if row_tile is None:
        row_tile = _pick_row_tile(
            rows,
            features,
            jnp.dtype(x.dtype).itemsize,
            jnp.dtype(x.dtype).itemsize,
            cfg["vmem_budget"],
        )

    # Contiguous reshape: no data movement. No padding — Pallas clips the
    # ragged last row block, and padded garbage rows (independent per-row
    # normalization) are never written back.
    x2d = x.reshape(rows, features)
    a2d = a_2.reshape(1, features)
    b2d = b_2.reshape(1, features)

    kernel = functools.partial(_layernorm_kernel, eps=eps, features=features)
    grid = (pl.cdiv(rows, row_tile),)

    def _call(semantics):
        return pl.pallas_call(
            kernel,
            out_shape=jax.ShapeDtypeStruct((rows, features), x.dtype),
            grid_spec=pltpu.PrefetchScalarGridSpec(
                num_scalar_prefetch=0,
                grid=grid,
                in_specs=[
                    pl.BlockSpec((row_tile, features), lambda i: (i, 0)),
                    pl.BlockSpec((1, features), lambda i: (0, 0)),
                    pl.BlockSpec((1, features), lambda i: (0, 0)),
                ],
                out_specs=pl.BlockSpec((row_tile, features), lambda i: (i, 0)),
            ),
            compiler_params=pltpu.CompilerParams(
                dimension_semantics=semantics,
                vmem_limit_bytes=cfg["vmem_limit"],
            ),
        )(x2d, a2d, b2d)

    try:
        out2d = _call(cfg["semantics"])
    except Exception:
        if cfg["semantics"] == (pltpu.PARALLEL,):
            raise
        # CORE_PARALLEL unsupported on this part / version: safe fallback.
        out2d = _call((pltpu.PARALLEL,))

    return out2d.reshape(batch, seq, features)


def _reference(x, a_2, b_2, eps):
    xf = x.astype(jnp.float32)
    mean = jnp.mean(xf, axis=-1, keepdims=True)
    n = x.shape[-1]
    std = jnp.sqrt(jnp.sum((xf - mean) ** 2, axis=-1, keepdims=True) / (n - 1))
    return a_2.astype(jnp.float32) * (xf - mean) / (std + eps) + b_2.astype(
        jnp.float32
    )


if __name__ == "__main__":
    # 1) Small shapes consistent with the module: (batch, seq, hidden).
    batch, seq, features = 2, 8, 32
    key = jax.random.PRNGKey(0)
    x = jax.random.normal(key, (batch, seq, features), dtype=jnp.float32)
    # nn.Parameter(torch.ones(features)) / torch.zeros(features).
    a_2 = jnp.ones((features,), dtype=jnp.float32)
    b_2 = jnp.zeros((features,), dtype=jnp.float32)

    out = layer_norm(x, a_2, b_2, eps=1e-6)
    jax.block_until_ready(out)
    ref = _reference(x, a_2, b_2, 1e-6)
    assert jnp.allclose(out, ref, atol=1e-5, rtol=1e-5), "f32 mismatch vs reference"

    # 2) Ragged-grid path (rows not a tile multiple), lane-dense features.
    b2, s2, f2 = 3, 37, 256
    x2 = jax.random.normal(jax.random.PRNGKey(1), (b2, s2, f2), dtype=jnp.float32)
    a2 = jax.random.normal(jax.random.PRNGKey(2), (f2,), dtype=jnp.float32)
    c2 = jax.random.normal(jax.random.PRNGKey(3), (f2,), dtype=jnp.float32)
    out2 = layer_norm(x2, a2, c2, eps=1e-6)
    jax.block_until_ready(out2)
    ref2 = _reference(x2, a2, c2, 1e-6)
    assert jnp.allclose(out2, ref2, atol=1e-4, rtol=1e-4), "ragged mismatch"

    # 3) bf16 activations (dtype-aware tiling path).
    x3 = jax.random.normal(jax.random.PRNGKey(4), (2, 8, 128)).astype(jnp.bfloat16)
    a3 = jnp.ones((128,), dtype=jnp.bfloat16)
    c3 = jnp.zeros((128,), dtype=jnp.bfloat16)
    out3 = layer_norm(x3, a3, c3, eps=1e-6)
    jax.block_until_ready(out3)
    ref3 = _reference(x3, a3, c3, 1e-6)
    assert jnp.allclose(out3.astype(jnp.float32), ref3, atol=2e-2, rtol=2e-2), (
        "bf16 mismatch"
    )

    print("KERNEL_OK")
</pallas_src>

<mosaic_0001>
module attributes {stable_mosaic.version = 11 : i64} {
  func.func @_layernorm_kernel(%arg0: i32, %arg1: memref<16x32xf32, #tpu.memory_space<vmem>>, %arg2: memref<1x32xf32, #tpu.memory_space<vmem>>, %arg3: memref<1x32xf32, #tpu.memory_space<vmem>>, %arg4: memref<16x32xf32, #tpu.memory_space<vmem>>) attributes {dimension_semantics = [#tpu.dimension_semantics<parallel>], iteration_bounds = array<i64: 1>, scalar_prefetch = 0 : i64, scratch_operands = 0 : i64, tpu.core_type = #tpu.core_type<tc>, window_params = [{transform_indices = @transform_0, window_bounds = array<i64: 16, 32>}, {pipeline_mode = #tpu.pipeline_mode<synchronous>, transform_indices = @transform_1, window_bounds = array<i64: 1, 32>}, {pipeline_mode = #tpu.pipeline_mode<synchronous>, transform_indices = @transform_2, window_bounds = array<i64: 1, 32>}, {transform_indices = @transform_3, window_bounds = array<i64: 16, 32>}]} {
    %c0 = arith.constant 0 : index
    %c0_0 = arith.constant 0 : index
    %0 = vector.load %arg1[%c0, %c0_0] : memref<16x32xf32, #tpu.memory_space<vmem>>, vector<16x32xf32>
    %cst = arith.constant dense<0.000000e+00> : vector<16xf32>
    %1 = vector.multi_reduction <add>, %0, %cst [1] : vector<16x32xf32> to vector<16xf32>
    %2 = vector.shape_cast %1 : vector<16xf32> to vector<16x1xf32>
    %cst_1 = arith.constant 3.200000e+01 : f32
    %3 = vector.broadcast %cst_1 : f32 to vector<16x1xf32>
    %4 = arith.divf %2, %3 : vector<16x1xf32>
    %5 = vector.broadcast %4 : vector<16x1xf32> to vector<16x32xf32>
    %6 = arith.subf %0, %5 : vector<16x32xf32>
    %7 = arith.mulf %6, %6 : vector<16x32xf32>
    %cst_2 = arith.constant dense<0.000000e+00> : vector<16xf32>
    %8 = vector.multi_reduction <add>, %7, %cst_2 [1] : vector<16x32xf32> to vector<16xf32>
    %9 = vector.shape_cast %8 : vector<16xf32> to vector<16x1xf32>
    %cst_3 = arith.constant 0.0322580636 : f32
    %10 = vector.broadcast %cst_3 : f32 to vector<16x1xf32>
    %11 = arith.mulf %9, %10 : vector<16x1xf32>
    %12 = math.sqrt %11 : vector<16x1xf32>
    %cst_4 = arith.constant 9.99999997E-7 : f32
    %13 = vector.broadcast %cst_4 : f32 to vector<16x1xf32>
    %14 = arith.addf %12, %13 : vector<16x1xf32>
    %15 = tpu.reciprocal %14 {approx = true} : vector<16x1xf32> -> vector<16x1xf32>
    %16 = arith.mulf %14, %15 : vector<16x1xf32>
    %cst_5 = arith.constant 2.000000e+00 : f32
    %17 = vector.broadcast %cst_5 : f32 to vector<16x1xf32>
    %18 = arith.subf %17, %16 : vector<16x1xf32>
    %19 = arith.mulf %15, %18 : vector<16x1xf32>
    %c0_6 = arith.constant 0 : index
    %c0_7 = arith.constant 0 : index
    %20 = vector.load %arg2[%c0_6, %c0_7] : memref<1x32xf32, #tpu.memory_space<vmem>>, vector<1x32xf32>
    %c0_8 = arith.constant 0 : index
    %c0_9 = arith.constant 0 : index
    %21 = vector.load %arg3[%c0_8, %c0_9] : memref<1x32xf32, #tpu.memory_space<vmem>>, vector<1x32xf32>
    %22 = vector.broadcast %20 : vector<1x32xf32> to vector<16x32xf32>
    %23 = vector.broadcast %19 : vector<16x1xf32> to vector<16x32xf32>
    %24 = arith.mulf %22, %23 : vector<16x32xf32>
    %25 = arith.mulf %6, %24 : vector<16x32xf32>
    %26 = vector.broadcast %21 : vector<1x32xf32> to vector<16x32xf32>
    %27 = arith.addf %25, %26 : vector<16x32xf32>
    %c0_10 = arith.constant 0 : index
    %c0_11 = arith.constant 0 : index
    %28 = vector.load %arg4[%c0_10, %c0_11] : memref<16x32xf32, #tpu.memory_space<vmem>>, vector<16x32xf32>
    tpu.vector_store %arg4[%c0_10, %c0_11], %27 {strides = array<i32>} : memref<16x32xf32, #tpu.memory_space<vmem>>, vector<16x32xf32>,
    return
  }
  func.func @transform_0(%arg0: i32) -> (i32, i32) {
    %c0_i32 = arith.constant 0 : i32
    %c0_i32_0 = arith.constant 0 : i32
    return %arg0, %c0_i32 : i32, i32
  }
  func.func @transform_1(%arg0: i32) -> (i32, i32) {
    %c0_i32 = arith.constant 0 : i32
    %c0_i32_0 = arith.constant 0 : i32
    %c0_i32_1 = arith.constant 0 : i32
    return %c0_i32, %c0_i32_0 : i32, i32
  }
  func.func @transform_2(%arg0: i32) -> (i32, i32) {
    %c0_i32 = arith.constant 0 : i32
    %c0_i32_0 = arith.constant 0 : i32
    %c0_i32_1 = arith.constant 0 : i32
    return %c0_i32, %c0_i32_0 : i32, i32
  }
  func.func @transform_3(%arg0: i32) -> (i32, i32) {
    %c0_i32 = arith.constant 0 : i32
    %c0_i32_0 = arith.constant 0 : i32
    return %arg0, %c0_i32 : i32, i32
  }
}

</mosaic_0001>

<llo_original>
// kernel: tpu_custom_call.1
$region0: #{tpu_custom_call.1}
  #allocation0 [shape = 'u32[]', space=smem, size = 0x4, offset = 0x4, fixed_abs, tag = 'smem constant byte address 0x4 - core index']
  #allocation1 [shape = 'u32[144,128]{1,0:T(1,128)}', space=vmem, size = 0x12000, scoped, tag = 'internal scratch']
  %s0 = inlined_call_operand.hbm [shape: f32[16,32], index: 0, kind: input, shape index: {}]
  %s1 = inlined_call_operand.vmem [shape: f32[1,32], index: 1, kind: input, shape index: {}]
  %s2 = inlined_call_operand.vmem [shape: f32[1,32], index: 2, kind: input, shape index: {}]
  %s3 = inlined_call_operand.hbm [shape: f32[16,32], index: 3, kind: output, shape index: {}]
  %s4 = sld [smem:[#allocation0]]
  $region26: #{tpu_custom_call.1} parent=0
    _
  %s6 = ssub.s32 1, %s4
  %s7 = scalar_select 0, %s6, %s4
  $region1: #{tpu_custom_call.1} parent=0
    #allocation2 [shape = 'u8[8192]{0}', space=vmem, size = 0x2000, scoped, tag = 'input window, operand 0, single buffered']
    #allocation3 [shape = 's32[1]{0}', space=sflag, size = 0x4, scoped, tag = 'scoped memory for tpu_custom_call.1']
    #allocation4 [shape = 's32[1]{0}', space=sflag, size = 0x4, scoped, tag = 'scoped memory for tpu_custom_call.1']
    #allocation5 [shape = 'u8[8192]{0}', space=vmem, size = 0x2000, scoped, tag = 'output window, operand 0, single buffered']
    %8 = vsyncpa [#allocation3], 0
    %9 = vsyncpa [#allocation4], 0
    // Predicated region
    $region2: #{tpu_custom_call.1} parent=1 // pred_check
      _
    $region3: #{tpu_custom_call.1} parent=1 // pred_check_branch
      %11 = sbr.rel (0) target = $region5
    $region4: #{tpu_custom_call.1} parent=1 // pred_region
      %s13 = ssub.s32 256, 256
      %14 = vsyncadd [#allocation3], %s13
      %s15 = sshll.u32 [#allocation2], 4
      %s16 = int_to_ptr.vmem [resolvable:$true] %s15
      %21 = dma.hbm_to_vmem [thread:$0]  %s0, 256, %s16, [#allocation3], 128, 128, 8
    $region5: #{tpu_custom_call.1} parent=1 // pred_fallthru
      _
    // Predicated region
    $region6: #{tpu_custom_call.1} parent=1 // pred_check
      _
    $region7: #{tpu_custom_call.1} parent=1 // pred_check_branch
      %23 = sbr.rel (0) target = $region9
    $region8: #{tpu_custom_call.1} parent=1 // pred_region
      _
    $region9: #{tpu_custom_call.1} parent=1 // pred_fallthru
      _
    // Predicated region
    $region10: #{tpu_custom_call.1} parent=1 // pred_check
      _
    $region11: #{tpu_custom_call.1} parent=1 // pred_check_branch
      %25 = sbr.rel (0) target = $region13
    $region12: #{tpu_custom_call.1} parent=1 // pred_region
      _
    $region13: #{tpu_custom_call.1} parent=1 // pred_fallthru
      _
    // Predicated region
    $region14: #{tpu_custom_call.1} parent=1 // pred_check
      _
    $region15: #{tpu_custom_call.1} parent=1 // pred_check_branch
      %27 = sbr.rel (0) target = $region17
    $region16: #{tpu_custom_call.1} parent=1 // pred_region
      %28 = dma.done [#allocation3], 256
    $region17: #{tpu_custom_call.1} parent=1 // pred_fallthru
      _
    %v29 = vld [vmem:[#allocation2] sm:$0xff]
    %v30 = vld [vmem:[#allocation2 + $0x8] sm:$0xff]
    %vm31 = vcmask 261120
    %v32 = vsel %vm31, %v29, 0.0
    %33 = vadd.xlane.f32.xlu0 %v32
    %v34 = vpop.xlane.xlu0 %33
    %v35 = vsel %vm31, %v30, 0.0
    %36 = vadd.xlane.f32.xlu0 %v35
    %v37 = vpop.xlane.xlu0 %36
    %v38 = vrcp.pop 32.0
    %v39 = vmul.f32 %v34, %v38
    %v40 = vmul.f32 %v37, %v38
    %v41 = vsub.f32 %v29, %v39
    %v42 = vsub.f32 %v30, %v40
    %v43 = vmul.f32 %v41, %v41
    %v44 = vmul.f32 %v42, %v42
    %v45 = vsel %vm31, %v43, 0.0
    %46 = vadd.xlane.f32.xlu0 %v45
    %v47 = vpop.xlane.xlu0 %46
    %v48 = vsel %vm31, %v44, 0.0
    %49 = vadd.xlane.f32.xlu0 %v48
    %v50 = vpop.xlane.xlu0 %49
    %v51 = vmul.f32 %v47, 0.032258064
    %v52 = vmul.f32 %v50, 0.032258064
    %v53 = vrsqrt.pop %v51
    %v54 = vmul.f32 %v51, %v53
    %vm55 = vcmp.eq.f32.partialorder %v51, inf
    %v56 = vsel %vm55, %v51, %v54
    %vm57 = vcmp.eq.f32.partialorder %v51, 0.0
    %v58 = vand.u32 %v51, 2147483648
    %v59 = vsel %vm57, %v58, %v56
    %v60 = vrsqrt.pop %v52
    %v61 = vmul.f32 %v52, %v60
    %vm62 = vcmp.eq.f32.partialorder %v52, inf
    %v63 = vsel %vm62, %v52, %v61
    %vm64 = vcmp.eq.f32.partialorder %v52, 0.0
    %v65 = vand.u32 %v52, 2147483648
    %v66 = vsel %vm64, %v65, %v63
    %v67 = vadd.f32 %v59, 1e-06
    %v68 = vadd.f32 %v66, 1e-06
    %v69 = vrcp.pop %v67
    %v70 = vrcp.pop %v68
    %v71 = vmul.f32 %v67, %v69
    %v72 = vmul.f32 %v68, %v70
    %v73 = vsub.f32 2.0, %v71
    %v74 = vsub.f32 2.0, %v72
    %v75 = vmul.f32 %v69, %v73
    %v76 = vmul.f32 %v70, %v74
    %v77 = vld [vmem:[%s1] sm:$0x1]
    %v78 = vld [vmem:[%s2] sm:$0x1]
    %v80 = vlaneseq
    %v81 = vshrl.u32 %v80, 7
    %v82 = vsub.s32 0, %v81
    %v83 = vrot.slane %v77, %v82
    %v85 = vmul.f32 %v83, %v75
    %v86 = vmul.f32 %v83, %v76
    %v87 = vmul.f32 %v41, %v85
    %v88 = vmul.f32 %v42, %v86
    %v90 = vlaneseq
    %v91 = vshrl.u32 %v90, 7
    %v92 = vsub.s32 0, %v91
    %v93 = vrot.slane %v78, %v92
    %v95 = vadd.f32 %v87, %v93
    %v96 = vadd.f32 %v88, %v93
    %97 = vst.msk [vmem:[#allocation5] sm:$0xff] %vm31, %v95
    %98 = vst.msk [vmem:[#allocation5 + $0x8] sm:$0xff] %vm31, %v96
    // Predicated region
    $region18: #{tpu_custom_call.1} parent=1 // pred_check
      _
    $region19: #{tpu_custom_call.1} parent=1 // pred_check_branch
      %100 = sbr.rel (0) target = $region21
    $region20: #{tpu_custom_call.1} parent=1 // pred_region
      %s102 = ssub.s32 256, 256
      %103 = vsyncadd [#allocation4], %s102
      %s104 = sshll.u32 [#allocation5], 4
      %s105 = int_to_ptr.vmem [resolvable:$true] %s104
      %110 = dma.vmem_to_hbm [thread:$0]  %s105, 256, %s3, [#allocation4], 128, 128, 8
    $region21: #{tpu_custom_call.1} parent=1 // pred_fallthru
      _
    // Predicated region
    $region22: #{tpu_custom_call.1} parent=1 // pred_check
      _
    $region23: #{tpu_custom_call.1} parent=1 // pred_check_branch
      %112 = sbr.rel (0) target = $region25
    $region24: #{tpu_custom_call.1} parent=1 // pred_region
      %113 = dma.done [#allocation4], 256
    $region25: #{tpu_custom_call.1} parent=1 // pred_fallthru
      _
    %114 = vsyncpa [#allocation3], 1
    %115 = vsyncpa [#allocation4], 1

</llo_original>
